<compile_context>
chip_gen: v6e
topology: v6e:2x2x1
jax: 0.10.0
libtpu: 0.0.40
codegen_flags: <defaults>
</compile_context>

<pallas_src>
import jax
import jax.numpy as jnp
from jax.experimental import pallas as pl
from jax.experimental.pallas import tpu as pltpu

HIDDEN = 64
H_PAD = 128   # lane-dense hidden width (zero-padded, identity-preserving)
C_PAD = 128   # lane-dense class/output width


def ffnn_kernel(x_ref, w1_ref, b1_ref, w2_ref, b2_ref, o_ref):
    # x arrives f32 from HBM; cast to bf16 in VMEM (hides under the DMA).
    x = x_ref[...].astype(jnp.bfloat16)                       # (TB, F)
    # fc1: bf16 MXU inputs, f32 accumulation; bias + ReLU in f32.
    h = jnp.dot(x, w1_ref[...], preferred_element_type=jnp.float32) + b1_ref[...]
    h = jnp.maximum(h, 0.0)                                    # (TB, H_PAD)
    # TODO(synk): dropout(p=0.2) is identity in eval/inference mode; training-mode
    # stochastic masking (pltpu.prng_random_bits) intentionally not applied here.
    # fc2 into lane-padded (TB, 128) logits; padded class lanes carry bias -1e30.
    logits = jnp.dot(h.astype(jnp.bfloat16), w2_ref[...],
                     preferred_element_type=jnp.float32) + b2_ref[...]
    # Stable softmax over classes; exp(-1e30 - m) underflows to exactly 0.
    m = jnp.max(logits, axis=-1, keepdims=True)
    e = jnp.exp(logits - m)
    denom = jnp.sum(e, axis=-1, keepdims=True)
    inv = pl.reciprocal(denom, approx=True)                    # EUP slot
    o_ref[...] = (e * inv).astype(o_ref.dtype)


def basic_ffnn_forward(x, w1, b1, w2, b2, *, block_b=1024):
    """x: (B, F) f32. w1: (F, 64), b1: (1, 64), w2: (64, C), b2: (1, C).
    Returns softmax probabilities (B, C) f32."""
    B, F = x.shape
    H = w1.shape[1]
    C = w2.shape[1]
    assert H == HIDDEN and H <= H_PAD and C <= C_PAD

    def round_up(v, m):
        return ((v + m - 1) // m) * m

    # Batch tile: as large as requested, multiple of 8 sublanes, but capped so
    # the grid keeps >=4 steps (keeps both v7x TensorCores busy; cheap elsewhere).
    tb = min(block_b, round_up(B, 8))
    tb = min(tb, round_up(pl.cdiv(B, 4), 8))
    tb = max(8, (tb // 8) * 8)
    grid = (pl.cdiv(B, tb),)          # ragged final block handled by Pallas

    # Resident weights, padded to lane-dense widths (identity-preserving):
    #   W1 -> (F, 128) zero-padded cols, b1 -> (1, 128) zero-padded lanes
    #   W2 -> (128, 128) zero-padded rows/cols, b2 -> (1, 128) with -1e30 pad.
    w1_p = jnp.zeros((F, H_PAD), jnp.bfloat16).at[:, :H].set(w1.astype(jnp.bfloat16))
    b1_p = jnp.zeros((1, H_PAD), jnp.float32).at[:, :H].set(
        b1.reshape(1, H).astype(jnp.float32))
    w2_p = jnp.zeros((H_PAD, C_PAD), jnp.bfloat16).at[:H, :C].set(
        w2.astype(jnp.bfloat16))
    b2_p = jnp.full((1, C_PAD), -1e30, jnp.float32).at[:, :C].set(
        b2.reshape(1, C).astype(jnp.float32))

    cost = pl.CostEstimate(
        flops=2 * B * (F * H_PAD + H_PAD * C_PAD),
        transcendentals=B * (C_PAD + 1),
        bytes_accessed=(x.size * 4 + w1_p.size * 2 + w2_p.size * 2
                        + b1_p.size * 4 + b2_p.size * 4 + B * C_PAD * 4),
    )

    out = pl.pallas_call(
        ffnn_kernel,
        out_shape=jax.ShapeDtypeStruct((B, C_PAD), jnp.float32),
        grid=grid,
        in_specs=[
            pl.BlockSpec((tb, F), lambda i: (i, 0)),            # x tile (f32)
            pl.BlockSpec((F, H_PAD), lambda i: (0, 0)),         # W1 resident
            pl.BlockSpec((1, H_PAD), lambda i: (0, 0)),         # b1 resident
            pl.BlockSpec((H_PAD, C_PAD), lambda i: (0, 0)),     # W2 resident
            pl.BlockSpec((1, C_PAD), lambda i: (0, 0)),         # b2 resident
        ],
        out_specs=pl.BlockSpec((tb, C_PAD), lambda i: (i, 0)),
        compiler_params=pltpu.CompilerParams(
            dimension_semantics=("parallel",),                  # megacore-friendly
        ),
        cost_estimate=cost,
    )(x, w1_p, b1_p, w2_p, b2_p)

    # Lane slice back to the real class count (batch already exact: no pad pass).
    return out[:, :C]


def init_params(key, in_features, num_classes, hidden=HIDDEN):
    """Deterministic PyTorch-style uniform(-1/sqrt(fan_in), 1/sqrt(fan_in)) init."""
    k1, k2, k3, k4 = jax.random.split(key, 4)
    bound1 = 1.0 / jnp.sqrt(in_features)
    bound2 = 1.0 / jnp.sqrt(hidden)
    # Stored already transposed: (in, out)
    w1 = jax.random.uniform(k1, (in_features, hidden), jnp.float32, -bound1, bound1)
    b1 = jax.random.uniform(k2, (1, hidden), jnp.float32, -bound1, bound1)
    w2 = jax.random.uniform(k3, (hidden, num_classes), jnp.float32, -bound2, bound2)
    b2 = jax.random.uniform(k4, (1, num_classes), jnp.float32, -bound2, bound2)
    return w1, b1, w2, b2


if __name__ == "__main__":
    key = jax.random.PRNGKey(0)
    kx, kp = jax.random.split(key)

    batch = 200          # non-multiple of the tile -> exercises the ragged last block
    in_features = 32
    num_classes = 10

    x = jax.random.normal(kx, (batch, in_features), dtype=jnp.float32)
    w1, b1, w2, b2 = init_params(kp, in_features, num_classes)

    out = basic_ffnn_forward(x, w1, b1, w2, b2)
    out = jax.block_until_ready(out)

    # Reference in plain JAX with matching bf16-matmul / f32-accumulate numerics
    # (eval-mode dropout = identity; hidden/class padding is mathematically inert).
    xb = x.astype(jnp.bfloat16)
    w1b = w1.astype(jnp.bfloat16)
    w2b = w2.astype(jnp.bfloat16)
    h_ref = jnp.maximum(jnp.dot(xb, w1b, preferred_element_type=jnp.float32) + b1, 0.0)
    logits_ref = jnp.dot(h_ref.astype(jnp.bfloat16), w2b,
                         preferred_element_type=jnp.float32) + b2
    ref = jax.nn.softmax(logits_ref, axis=1)

    assert out.shape == (batch, num_classes)
    assert jnp.all(jnp.isfinite(out))
    # tolerance covers the EUP approximate reciprocal in the kernel softmax
    assert jnp.allclose(out, ref, atol=5e-3, rtol=5e-3)
    assert jnp.allclose(jnp.sum(out, axis=1), 1.0, atol=5e-3)

    print("KERNEL_OK")
</pallas_src>

<mosaic_0001>
module attributes {stable_mosaic.version = 11 : i64} {
  func.func @ffnn_kernel(%arg0: i32, %arg1: memref<56x32xf32, #tpu.memory_space<vmem>>, %arg2: memref<32x128xbf16, #tpu.memory_space<vmem>>, %arg3: memref<1x128xf32, #tpu.memory_space<vmem>>, %arg4: memref<128x128xbf16, #tpu.memory_space<vmem>>, %arg5: memref<1x128xf32, #tpu.memory_space<vmem>>, %arg6: memref<56x128xf32, #tpu.memory_space<vmem>>) attributes {dimension_semantics = [#tpu.dimension_semantics<parallel>], iteration_bounds = array<i64: 4>, scalar_prefetch = 0 : i64, scratch_operands = 0 : i64, tpu.core_type = #tpu.core_type<tc>, window_params = [{transform_indices = @transform_0, window_bounds = array<i64: 56, 32>}, {pipeline_mode = #tpu.pipeline_mode<synchronous>, transform_indices = @transform_1, window_bounds = array<i64: 32, 128>}, {pipeline_mode = #tpu.pipeline_mode<synchronous>, transform_indices = @transform_2, window_bounds = array<i64: 1, 128>}, {pipeline_mode = #tpu.pipeline_mode<synchronous>, transform_indices = @transform_3, window_bounds = array<i64: 128, 128>}, {pipeline_mode = #tpu.pipeline_mode<synchronous>, transform_indices = @transform_4, window_bounds = array<i64: 1, 128>}, {transform_indices = @transform_5, window_bounds = array<i64: 56, 128>}]} {
    %c0 = arith.constant 0 : index
    %c0_0 = arith.constant 0 : index
    %0 = vector.load %arg1[%c0, %c0_0] : memref<56x32xf32, #tpu.memory_space<vmem>>, vector<56x32xf32>
    %1 = arith.truncf %0 : vector<56x32xf32> to vector<56x32xbf16>
    %c0_1 = arith.constant 0 : index
    %c0_2 = arith.constant 0 : index
    %2 = vector.load %arg2[%c0_1, %c0_2] : memref<32x128xbf16, #tpu.memory_space<vmem>>, vector<32x128xbf16>
    %cst = arith.constant dense<0.000000e+00> : vector<56x128xf32>
    %3 = tpu.matmul %1, %2, %cst {dimension_numbers = #tpu.dot_dimension_numbers<[1], [0], [0], [1], [0, 0, 1, 1], [], []>} : vector<56x32xbf16>, vector<32x128xbf16>, vector<56x128xf32> -> vector<56x128xf32>
    %c0_3 = arith.constant 0 : index
    %c0_4 = arith.constant 0 : index
    %4 = vector.load %arg3[%c0_3, %c0_4] : memref<1x128xf32, #tpu.memory_space<vmem>>, vector<1x128xf32>
    %5 = vector.broadcast %4 : vector<1x128xf32> to vector<56x128xf32>
    %6 = arith.addf %3, %5 : vector<56x128xf32>
    %cst_5 = arith.constant 0.000000e+00 : f32
    %7 = vector.broadcast %cst_5 : f32 to vector<56x128xf32>
    %8 = arith.maximumf %6, %7 : vector<56x128xf32>
    %9 = arith.truncf %8 : vector<56x128xf32> to vector<56x128xbf16>
    %c0_6 = arith.constant 0 : index
    %c0_7 = arith.constant 0 : index
    %10 = vector.load %arg4[%c0_6, %c0_7] : memref<128x128xbf16, #tpu.memory_space<vmem>>, vector<128x128xbf16>
    %cst_8 = arith.constant dense<0.000000e+00> : vector<56x128xf32>
    %11 = tpu.matmul %9, %10, %cst_8 {dimension_numbers = #tpu.dot_dimension_numbers<[1], [0], [0], [1], [0, 0, 1, 1], [], []>} : vector<56x128xbf16>, vector<128x128xbf16>, vector<56x128xf32> -> vector<56x128xf32>
    %c0_9 = arith.constant 0 : index
    %c0_10 = arith.constant 0 : index
    %12 = vector.load %arg5[%c0_9, %c0_10] : memref<1x128xf32, #tpu.memory_space<vmem>>, vector<1x128xf32>
    %13 = vector.broadcast %12 : vector<1x128xf32> to vector<56x128xf32>
    %14 = arith.addf %11, %13 : vector<56x128xf32>
    %cst_11 = arith.constant dense<0xFF800000> : vector<56xf32>
    %15 = vector.multi_reduction <maximumf>, %14, %cst_11 [1] : vector<56x128xf32> to vector<56xf32>
    %16 = vector.shape_cast %15 : vector<56xf32> to vector<56x1xf32>
    %17 = vector.broadcast %16 : vector<56x1xf32> to vector<56x128xf32>
    %18 = arith.subf %14, %17 : vector<56x128xf32>
    %19 = math.exp %18 : vector<56x128xf32>
    %cst_12 = arith.constant dense<0.000000e+00> : vector<56xf32>
    %20 = vector.multi_reduction <add>, %19, %cst_12 [1] : vector<56x128xf32> to vector<56xf32>
    %21 = vector.shape_cast %20 : vector<56xf32> to vector<56x1xf32>
    %22 = tpu.reciprocal %21 {approx = true} : vector<56x1xf32> -> vector<56x1xf32>
    %23 = vector.broadcast %22 : vector<56x1xf32> to vector<56x128xf32>
    %24 = arith.mulf %19, %23 : vector<56x128xf32>
    %c0_13 = arith.constant 0 : index
    %c0_14 = arith.constant 0 : index
    %25 = vector.load %arg6[%c0_13, %c0_14] : memref<56x128xf32, #tpu.memory_space<vmem>>, vector<56x128xf32>
    tpu.vector_store %arg6[%c0_13, %c0_14], %24 {strides = array<i32>} : memref<56x128xf32, #tpu.memory_space<vmem>>, vector<56x128xf32>,
    return
  }
  func.func @transform_0(%arg0: i32) -> (i32, i32) {
    %c0_i32 = arith.constant 0 : i32
    %c0_i32_0 = arith.constant 0 : i32
    return %arg0, %c0_i32 : i32, i32
  }
  func.func @transform_1(%arg0: i32) -> (i32, i32) {
    %c0_i32 = arith.constant 0 : i32
    %c0_i32_0 = arith.constant 0 : i32
    %c0_i32_1 = arith.constant 0 : i32
    return %c0_i32, %c0_i32_0 : i32, i32
  }
  func.func @transform_2(%arg0: i32) -> (i32, i32) {
    %c0_i32 = arith.constant 0 : i32
    %c0_i32_0 = arith.constant 0 : i32
    %c0_i32_1 = arith.constant 0 : i32
    return %c0_i32, %c0_i32_0 : i32, i32
  }
  func.func @transform_3(%arg0: i32) -> (i32, i32) {
    %c0_i32 = arith.constant 0 : i32
    %c0_i32_0 = arith.constant 0 : i32
    %c0_i32_1 = arith.constant 0 : i32
    return %c0_i32, %c0_i32_0 : i32, i32
  }
  func.func @transform_4(%arg0: i32) -> (i32, i32) {
    %c0_i32 = arith.constant 0 : i32
    %c0_i32_0 = arith.constant 0 : i32
    %c0_i32_1 = arith.constant 0 : i32
    return %c0_i32, %c0_i32_0 : i32, i32
  }
  func.func @transform_5(%arg0: i32) -> (i32, i32) {
    %c0_i32 = arith.constant 0 : i32
    %c0_i32_0 = arith.constant 0 : i32
    return %arg0, %c0_i32 : i32, i32
  }
}

</mosaic_0001>

<llo_original>
// kernel: tpu_custom_call.1
$region0: #{tpu_custom_call.1}
  #allocation0 [shape = 'u32[]', space=smem, size = 0x4, offset = 0x4, fixed_abs, tag = 'smem constant byte address 0x4 - core index']
  #allocation1 [shape = 'u32[144,128]{1,0:T(1,128)}', space=vmem, size = 0x12000, scoped, tag = 'internal scratch']
  %s0 = inlined_call_operand.vmem [shape: f32[200,32], index: 0, kind: input, shape index: {}]
  %s1 = inlined_call_operand.vmem [shape: bf16[32,128], index: 1, kind: input, shape index: {}]
  %s2 = inlined_call_operand.vmem [shape: f32[1,128], index: 2, kind: input, shape index: {}]
  %s3 = inlined_call_operand.vmem [shape: bf16[128,128], index: 3, kind: input, shape index: {}]
  %s4 = inlined_call_operand.vmem [shape: f32[1,128], index: 4, kind: input, shape index: {}]
  %s5 = inlined_call_operand.hbm [shape: f32[200,128], index: 5, kind: output, shape index: {}]
  %s6 = sld [smem:[#allocation0]]
  $region53: #{tpu_custom_call.1} parent=0
    _
  %s8 = ssub.s32 1, %s6
  %s9 = scalar_select 0, %s8, %s6
  $region1: #{tpu_custom_call.1} parent=0
    #allocation2 [shape = 'u8[57344]{0}', space=vmem, size = 0xe000, scoped, tag = 'output window, operand 0']
    #allocation3 [shape = 's32[2]{0}', space=sflag, size = 0x8, scoped, tag = 'scoped memory for tpu_custom_call.1']
    %10 = vsyncpa [#allocation3], 0
    %s11 = scalar_lea.sflag [#allocation3], 1
    %12 = vsyncpa %s11, 0
    loop: start=0, step=1, limit=6
    $region2: #{tpu_custom_call.1} parent=1 // loop_pre_header
      _
    $region3: #{tpu_custom_call.1} parent=1 // loop_header
      %s14 = sphi 0, %s18
      %p15 = scmp.ge.s32.totalorder %s14, 6
      %s24 = sphi 0, %s26
      %s27 = sphi 0, %s24
      %s28 = sphi 0, %s27
      %s44 = sphi 0, %s28
      %s48 = sphi 0, %s48
      %s50 = sphi 0, %s48
      %s51 = sphi 0, %s50
      %s65 = sphi 0, %s51
      %s69 = sphi 0, %s69
      %s71 = sphi 0, %s69
      %s72 = sphi 0, %s71
      %s86 = sphi 0, %s72
      %s90 = sphi 0, %s90
      %s92 = sphi 0, %s90
      %s93 = sphi 0, %s92
      %s107 = sphi 0, %s93
      %s111 = sphi 0, %s111
      %s113 = sphi 0, %s111
      %s114 = sphi 0, %s113
      %s128 = sphi 0, %s114
      %s134 = sphi 0, %s136
      %s137 = sphi 0, %s134
      %s138 = sphi 0, %s137
      %s154 = sphi 0, %s138
    $region4: #{tpu_custom_call.1} parent=1 // loop_header_branch
      %17 = sbr.rel (%p15) target = $region8
    $region5: #{tpu_custom_call.1} parent=1 // loop_body
      %s19 = ssub.s32 %s14, 1
      %s20 = ssub.s32 %s14, 2
      %s21 = sadd.s32 %s14, 1
      %s22 = ssub.s32 %s14, %s21
      %p23 = scmp.eq.s32.totalorder %s22, 0
      %s25 = sadd.s32 %s24, 1
      %s26 = scalar_select %p23, %s24, %s25
      %p29 = pneg %p23
      %p30 = scmp.eq.s32.totalorder %s14, 3
      %p31 = por %p29, %p30
      %p32 = scmp.ne.s32.totalorder %s24, %s27
      %p33 = scmp.eq.s32.totalorder %s14, 0
      %p34 = por %p32, %p33
      %p35 = scmp.ne.s32.totalorder %s24, %s27
      %p36 = scmp.eq.s32.totalorder %s19, 3
      %p37 = por %p35, %p36
      %p38 = scmp.ne.s32.totalorder %s27, %s28
      %p39 = scmp.eq.s32.totalorder %s19, 0
      %p40 = por %p38, %p39
      %p41 = scmp.ne.s32.totalorder %s27, %s28
      %p42 = scmp.eq.s32.totalorder %s20, 3
      %p43 = por %p41, %p42
      %p45 = scmp.ne.s32.totalorder %s28, %s44
      %p46 = scmp.eq.s32.totalorder %s20, 0
      %p47 = por %p45, %p46
      %s49 = sadd.s32 %s48, 1
      %p52 = scmp.eq.s32.totalorder %s14, 3
      %p53 = scmp.ne.s32.totalorder %s48, %s50
      %p54 = scmp.eq.s32.totalorder %s14, 0
      %p55 = por %p53, %p54
      %p56 = scmp.ne.s32.totalorder %s48, %s50
      %p57 = scmp.eq.s32.totalorder %s19, 3
      %p58 = por %p56, %p57
      %p59 = scmp.ne.s32.totalorder %s50, %s51
      %p60 = scmp.eq.s32.totalorder %s19, 0
      %p61 = por %p59, %p60
      %p62 = scmp.ne.s32.totalorder %s50, %s51
      %p63 = scmp.eq.s32.totalorder %s20, 3
      %p64 = por %p62, %p63
      %p66 = scmp.ne.s32.totalorder %s51, %s65
      %p67 = scmp.eq.s32.totalorder %s20, 0
      %p68 = por %p66, %p67
      %s70 = sadd.s32 %s69, 1
      %p73 = scmp.eq.s32.totalorder %s14, 3
      %p74 = scmp.ne.s32.totalorder %s69, %s71
      %p75 = scmp.eq.s32.totalorder %s14, 0
      %p76 = por %p74, %p75
      %p77 = scmp.ne.s32.totalorder %s69, %s71
      %p78 = scmp.eq.s32.totalorder %s19, 3
      %p79 = por %p77, %p78
      %p80 = scmp.ne.s32.totalorder %s71, %s72
      %p81 = scmp.eq.s32.totalorder %s19, 0
      %p82 = por %p80, %p81
      %p83 = scmp.ne.s32.totalorder %s71, %s72
      %p84 = scmp.eq.s32.totalorder %s20, 3
      %p85 = por %p83, %p84
      %p87 = scmp.ne.s32.totalorder %s72, %s86
      %p88 = scmp.eq.s32.totalorder %s20, 0
      %p89 = por %p87, %p88
      %s91 = sadd.s32 %s90, 1
      %p94 = scmp.eq.s32.totalorder %s14, 3
      %p95 = scmp.ne.s32.totalorder %s90, %s92
      %p96 = scmp.eq.s32.totalorder %s14, 0
      %p97 = por %p95, %p96
      %p98 = scmp.ne.s32.totalorder %s90, %s92
      %p99 = scmp.eq.s32.totalorder %s19, 3
      %p100 = por %p98, %p99
      %p101 = scmp.ne.s32.totalorder %s92, %s93
      %p102 = scmp.eq.s32.totalorder %s19, 0
      %p103 = por %p101, %p102
      %p104 = scmp.ne.s32.totalorder %s92, %s93
      %p105 = scmp.eq.s32.totalorder %s20, 3
      %p106 = por %p104, %p105
      %p108 = scmp.ne.s32.totalorder %s93, %s107
      %p109 = scmp.eq.s32.totalorder %s20, 0
      %p110 = por %p108, %p109
      %s112 = sadd.s32 %s111, 1
      %p115 = scmp.eq.s32.totalorder %s14, 3
      %p116 = scmp.ne.s32.totalorder %s111, %s113
      %p117 = scmp.eq.s32.totalorder %s14, 0
      %p118 = por %p116, %p117
      %p119 = scmp.ne.s32.totalorder %s111, %s113
      %p120 = scmp.eq.s32.totalorder %s19, 3
      %p121 = por %p119, %p120
      %p122 = scmp.ne.s32.totalorder %s113, %s114
      %p123 = scmp.eq.s32.totalorder %s19, 0
      %p124 = por %p122, %p123
      %p125 = scmp.ne.s32.totalorder %s113, %s114
      %p126 = scmp.eq.s32.totalorder %s20, 3
      %p127 = por %p125, %p126
      %p129 = scmp.ne.s32.totalorder %s114, %s128
      %p130 = scmp.eq.s32.totalorder %s20, 0
      %p131 = por %p129, %p130
      %s132 = ssub.s32 %s14, %s21
      %p133 = scmp.eq.s32.totalorder %s132, 0
      %s135 = sadd.s32 %s134, 1
      %s136 = scalar_select %p133, %s134, %s135
      %p139 = pneg %p133
      %p140 = scmp.eq.s32.totalorder %s14, 3
      %p141 = por %p139, %p140
      %p142 = scmp.ne.s32.totalorder %s134, %s137
      %p143 = scmp.eq.s32.totalorder %s14, 0
      %p144 = por %p142, %p143
      %p145 = scmp.ne.s32.totalorder %s134, %s137
      %p146 = scmp.eq.s32.totalorder %s19, 3
      %p147 = por %p145, %p146
      %p148 = scmp.ne.s32.totalorder %s137, %s138
      %p149 = scmp.eq.s32.totalorder %s19, 0
      %p150 = por %p148, %p149
      %p151 = scmp.ne.s32.totalorder %s137, %s138
      %p152 = scmp.eq.s32.totalorder %s20, 3
      %p153 = por %p151, %p152
      %p155 = scmp.ne.s32.totalorder %s138, %s154
      %p156 = scmp.eq.s32.totalorder %s20, 0
      %p157 = por %p155, %p156
      %p158 = scmp.le.s32.totalorder 1, %s14
      %p159 = scmp.lt.s32.totalorder %s14, 5
      %p160 = pnand %p158, %p159
      %p161 = pneg %p160
      // Predicated region
      $region9: #{tpu_custom_call.1} parent=5 // pred_check
        _
      $region10: #{tpu_custom_call.1} parent=5 // pred_check_branch
        %163 = sbr.rel (%p160) target = $region12
      $region11: #{tpu_custom_call.1} parent=5 // pred_region
        %s164 = ssub.s32 %s14, 1
        // Predicated region
        $region13: #{tpu_custom_call.1} parent=11 // pred_check
          %p165 = pneg %p61
        $region14: #{tpu_custom_call.1} parent=11 // pred_check_branch
          %167 = sbr.rel (%p165) target = $region16
        $region15: #{tpu_custom_call.1} parent=11 // pred_region
          _
        $region16: #{tpu_custom_call.1} parent=11 // pred_fallthru
          _
        // Predicated region
        $region17: #{tpu_custom_call.1} parent=11 // pred_check
          %p168 = pneg %p82
        $region18: #{tpu_custom_call.1} parent=11 // pred_check_branch
          %170 = sbr.rel (%p168) target = $region20
        $region19: #{tpu_custom_call.1} parent=11 // pred_region
          _
        $region20: #{tpu_custom_call.1} parent=11 // pred_fallthru
          _
        // Predicated region
        $region21: #{tpu_custom_call.1} parent=11 // pred_check
          %p171 = pneg %p103
        $region22: #{tpu_custom_call.1} parent=11 // pred_check_branch
          %173 = sbr.rel (%p171) target = $region24
        $region23: #{tpu_custom_call.1} parent=11 // pred_region
          _
        $region24: #{tpu_custom_call.1} parent=11 // pred_fallthru
          _
        // Predicated region
        $region25: #{tpu_custom_call.1} parent=11 // pred_check
          %p174 = pneg %p124
        $region26: #{tpu_custom_call.1} parent=11 // pred_check_branch
          %176 = sbr.rel (%p174) target = $region28
        $region27: #{tpu_custom_call.1} parent=11 // pred_region
          _
        $region28: #{tpu_custom_call.1} parent=11 // pred_fallthru
          _
      $region12: #{tpu_custom_call.1} parent=5 // pred_fallthru
        _
      %p177 = scmp.lt.s32.totalorder %s14, 4
      // Predicated region
      $region29: #{tpu_custom_call.1} parent=5 // pred_check
        %p178 = pneg %p177
      $region30: #{tpu_custom_call.1} parent=5 // pred_check_branch
        %180 = sbr.rel (%p178) target = $region32
      $region31: #{tpu_custom_call.1} parent=5 // pred_region
        // Predicated region
        $region33: #{tpu_custom_call.1} parent=31 // pred_check
          %p181 = pneg %p34
        $region34: #{tpu_custom_call.1} parent=31 // pred_check_branch
          %183 = sbr.rel (%p181) target = $region36
        $region35: #{tpu_custom_call.1} parent=31 // pred_region
          %s184 = smul.u32 7, %s14
          %s185 = ssub.s32 25, %s184
          %p186 = scmp.lt.s32.totalorder %s185, 7
          %s187 = scalar_select %p186, %s185, 7
          %s188 = smul.u32 128, %s187
          %p189 = scmp.lt.s32.totalorder %s184, 24
          %s190 = scalar_select %p189, %s184, 24
          %s191 = smul.addr %s190, 8
          %s192 = scalar_lea.vmem %s0, %s191
          %s193 = smul.u32 7, %s14
          %s194 = ssub.s32 25, %s193
          %p195 = scmp.lt.s32.totalorder %s194, 7
          %s196 = scalar_select %p195, %s194, 7
          %s197 = smul.u32 128, %s196
        $region36: #{tpu_custom_call.1} parent=31 // pred_fallthru
          _
      $region32: #{tpu_custom_call.1} parent=5 // pred_fallthru
        _
      %p198 = scmp.le.s32.totalorder 1, %s14
      %p199 = scmp.lt.s32.totalorder %s14, 5
      %p200 = pnand %p198, %p199
      %p201 = pneg %p200
      // Predicated region
      $region37: #{tpu_custom_call.1} parent=5 // pred_check
        _
      $region38: #{tpu_custom_call.1} parent=5 // pred_check_branch
        %203 = sbr.rel (%p200) target = $region40
      $region39: #{tpu_custom_call.1} parent=5 // pred_region
        %s204 = ssub.s32 %s14, 1
        %s205 = smul.u32 7, %s19
        %s206 = ssub.s32 25, %s205
        %p207 = scmp.lt.s32.totalorder %s206, 7
        %s208 = scalar_select %p207, %s206, 7
        %s209 = smul.u32 128, %s208
        %p210 = scmp.lt.s32.totalorder %s205, 24
        %s211 = scalar_select %p210, %s205, 24
        %s212 = smul.addr %s211, 8
        %s213 = scalar_lea.vmem %s0, %s212
        %p214 = pneg %p40
        %p215 = pneg %p37
        %p216 = pneg %p61
        %p217 = pneg %p58
        %p218 = pneg %p82
        %p219 = pneg %p79
        %p220 = pneg %p103
        %p221 = pneg %p100
        %p222 = pneg %p124
        %p223 = pneg %p121
        %p224 = pneg %p150
        %p225 = pneg %p147
        %s226 = sand.u32 %s137, 1
        %s227 = scalar_lea.sflag [#allocation3], %s226
        %s228 = sand.u32 %s137, 1
        %s229 = smul.addr %s228, 56
        %s230 = scalar_lea.vmem [#allocation2], %s229
        %s231 = smul.u32 7, %s19
        %s232 = ssub.s32 25, %s231
        %p233 = scmp.lt.s32.totalorder %s232, 7
        %s234 = scalar_select %p233, %s232, 7
        %s235 = smul.u32 128, %s234
        %p236 = scmp.lt.s32.totalorder %s231, 24
        %s237 = scalar_select %p236, %s231, 24
        %s238 = smul.addr %s237, 8
        %s239 = scalar_lea.vmem %s0, %s238
        %s240 = smul.u32 7, %s19
        %s241 = ssub.s32 25, %s240
        %p242 = scmp.lt.s32.totalorder %s241, 7
        %s243 = scalar_select %p242, %s241, 7
        %s244 = smul.u32 128, %s243
        %s245 = smul.u32 7, %s19
        %s246 = ssub.s32 25, %s245
        %p247 = scmp.lt.s32.totalorder %s246, 7
        %s248 = scalar_select %p247, %s246, 7
        %s249 = smul.u32 128, %s248
        %v251 = vld [vmem:[%s239] sm:$0xff]
        %v252 = vld [vmem:[%s239 + $0x8] sm:$0xff]
        %v253 = vld [vmem:[%s239 + $0x10] sm:$0xff]
        %v254 = vld [vmem:[%s239 + $0x18] sm:$0xff]
        %v255 = vld [vmem:[%s239 + $0x20] sm:$0xff]
        %v256 = vld [vmem:[%s239 + $0x28] sm:$0xff]
        %v257 = vld [vmem:[%s239 + $0x30] sm:$0xff]
        %v258 = vpack.c.bf16 %v252, %v251
        %v259 = vpack.c.bf16 %v254, %v253
        %v260 = vpack.c.bf16 %v256, %v255
        %v261 = vpack.c.bf16 %v257, %v257
        %v262 = vld [vmem:[%s1] sm:$0xf]
        %v263 = vld [vmem:[%s1 + $0x4] sm:$0xf]
        %v264 = vld [vmem:[%s1 + $0x8] sm:$0xf]
        %v265 = vld [vmem:[%s1 + $0xc] sm:$0xf]
        %v266 = vld [vmem:[%s2] sm:$0x1]
        %v268 = vlaneseq
        %v269 = vshrl.u32 %v268, 7
        %v270 = vsub.s32 0, %v269
        %v271 = vrot.slane %v266, %v270
        %v277 = vunpack.c.l.b16 %v262
        %v278 = vunpack.c.l.b16 %v263
        %v279 = vunpack.c.l.b16 %v264
        %v280 = vunpack.c.l.b16 %v265
        %v281 = vpack.c.b16 %v278, %v277
        %v282 = vpack.c.b16 %v280, %v279
        %vm285 = vcmask 261120
        %v287 = vsel %vm285, %v258, 0
        %v290 = vsel %vm285, %v259, 0
        %v293 = vsel %vm285, %v260, 0
        %v296 = vsel %vm285, %v261, 0
        %298 = vmatprep.subr.bf16.mxu0 0
        %299 = vmatpush1.bf16.msra.mxu0 0
        %300 = vmatprep.subr.bf16.mxu0 0
        %301 = vmatpush1.bf16.msra.mxu0 0
        %302 = vmatprep.subr.bf16.mxu0 0
        %303 = vmatpush1.bf16.msra.mxu0 0
        %304 = vmatprep.subr.bf16.mxu0 0
        %305 = vmatpush1.bf16.msra.mxu0 0
        %306 = vmatprep.subr.bf16.mxu0 0
        %307 = vmatpush1.bf16.msra.mxu0 0
        %308 = vmatprep.subr.bf16.mxu0 0
        %309 = vmatpush1.bf16.msra.mxu0 0
        %310 = vmatprep.subr.bf16.mxu0 0
        %311 = vmatpush1.bf16.msra.mxu0 %v282
        %312 = vmatprep.subr.bf16.mxu0 0
        %313 = vmatpush1.bf16.msra.mxu0 %v281
        %314 = vmatprep.subr.bf16.mxu0 0
        %315 = vmatpush2.bf16.msra.mxu0 0
        %316 = vmatprep.subr.bf16.mxu0 0
        %317 = vmatpush2.bf16.msra.mxu0 0
        %318 = vmatprep.subr.bf16.mxu0 0
        %319 = vmatpush2.bf16.msra.mxu0 0
        %320 = vmatprep.subr.bf16.mxu0 0
        %321 = vmatpush2.bf16.msra.mxu0 0
        %322 = vmatprep.subr.bf16.mxu0 0
        %323 = vmatpush2.bf16.msra.mxu0 0
        %324 = vmatprep.subr.bf16.mxu0 0
        %325 = vmatpush2.bf16.msra.mxu0 0
        %326 = vmatprep.subr.bf16.mxu0 0
        %327 = vmatpush2.bf16.msra.mxu0 0
        %328 = vmatprep.subr.bf16.mxu0 0
        %329 = vmatpush2.bf16.msra.mxu0 0
        %330 = vmatprep.mubr.bf16.mxu0 0
        %331 = vmatmul.mubr.bf16.gmra.mxu0 %v287
        %v332 = vpop.f32.mrf.mxu0
        %v333 = vadd.f32 %v271, %v332
        %v334 = vpop.f32.mrf.mxu0
        %v335 = vpop.f32.mrf.mxu0
        %v336 = vadd.f32 %v271, %v335
        %v337 = vpop.f32.mrf.mxu0
        %338 = vmatprep.mubr.bf16.mxu0 0
        %339 = vmatmul.mubr.bf16.gmra.mxu0 %v290
        %v340 = vpop.f32.mrf.mxu0
        %v341 = vadd.f32 %v271, %v340
        %v342 = vpop.f32.mrf.mxu0
        %v343 = vpop.f32.mrf.mxu0
        %v344 = vadd.f32 %v271, %v343
        %v345 = vpop.f32.mrf.mxu0
        %346 = vmatprep.mubr.bf16.mxu0 0
        %347 = vmatmul.mubr.bf16.gmra.mxu0 %v293
        %v348 = vpop.f32.mrf.mxu0
        %v349 = vadd.f32 %v271, %v348
        %v350 = vpop.f32.mrf.mxu0
        %v351 = vpop.f32.mrf.mxu0
        %v352 = vadd.f32 %v271, %v351
        %v353 = vpop.f32.mrf.mxu0
        %354 = vmatprep.mubr.bf16.mxu0 0
        %355 = vmatmul.mubr.bf16.gmra.mxu0 %v296
        %v356 = vpop.f32.mrf.mxu0
        %v357 = vadd.f32 %v271, %v356
        %v358 = vpop.f32.mrf.mxu0
        %v359 = vpop.f32.mrf.mxu0
        %v360 = vpop.f32.mrf.mxu0
        %361 = vdwg.mxu0
        %v362 = vmax.f32 %v333, 0.0
        %v363 = vmax.f32 %v336, 0.0
        %v364 = vmax.f32 %v341, 0.0
        %v365 = vmax.f32 %v344, 0.0
        %v366 = vmax.f32 %v349, 0.0
        %v367 = vmax.f32 %v352, 0.0
        %v368 = vmax.f32 %v357, 0.0
        %v369 = vpack.c.bf16 %v363, %v362
        %v370 = vpack.c.bf16 %v365, %v364
        %v371 = vpack.c.bf16 %v367, %v366
        %v372 = vpack.c.bf16 %v368, %v368
        %v373 = vld [vmem:[%s3] sm:$0xf]
        %v374 = vld [vmem:[%s3 + $0x4] sm:$0xf]
        %v375 = vld [vmem:[%s3 + $0x8] sm:$0xf]
        %v376 = vld [vmem:[%s3 + $0xc] sm:$0xf]
        %v377 = vld [vmem:[%s3 + $0x10] sm:$0xf]
        %v378 = vld [vmem:[%s3 + $0x14] sm:$0xf]
        %v379 = vld [vmem:[%s3 + $0x18] sm:$0xf]
        %v380 = vld [vmem:[%s3 + $0x1c] sm:$0xf]
        %v381 = vld [vmem:[%s3 + $0x20] sm:$0xf]
        %v382 = vld [vmem:[%s3 + $0x24] sm:$0xf]
        %v383 = vld [vmem:[%s3 + $0x28] sm:$0xf]
        %v384 = vld [vmem:[%s3 + $0x2c] sm:$0xf]
        %v385 = vld [vmem:[%s3 + $0x30] sm:$0xf]
        %v386 = vld [vmem:[%s3 + $0x34] sm:$0xf]
        %v387 = vld [vmem:[%s3 + $0x38] sm:$0xf]
        %v388 = vld [vmem:[%s3 + $0x3c] sm:$0xf]
        %v389 = vld [vmem:[%s4] sm:$0x1]
        %v391 = vlaneseq
        %v392 = vshrl.u32 %v391, 7
        %v393 = vsub.s32 0, %v392
        %v394 = vrot.slane %v389, %v393
        %v412 = vunpack.c.l.b16 %v373
        %v413 = vunpack.c.l.b16 %v374
        %v414 = vunpack.c.l.b16 %v375
        %v415 = vunpack.c.l.b16 %v376
        %v416 = vunpack.c.l.b16 %v377
        %v417 = vunpack.c.l.b16 %v378
        %v418 = vunpack.c.l.b16 %v379
        %v419 = vunpack.c.l.b16 %v380
        %v420 = vunpack.c.l.b16 %v381
        %v421 = vunpack.c.l.b16 %v382
        %v422 = vunpack.c.l.b16 %v383
        %v423 = vunpack.c.l.b16 %v384
        %v424 = vunpack.c.l.b16 %v385
        %v425 = vunpack.c.l.b16 %v386
        %v426 = vunpack.c.l.b16 %v387
        %v427 = vunpack.c.l.b16 %v388
        %v428 = vpack.c.b16 %v413, %v412
        %v429 = vpack.c.b16 %v415, %v414
        %v430 = vpack.c.b16 %v417, %v416
        %v431 = vpack.c.b16 %v419, %v418
        %v432 = vpack.c.b16 %v421, %v420
        %v433 = vpack.c.b16 %v423, %v422
        %v434 = vpack.c.b16 %v425, %v424
        %v435 = vpack.c.b16 %v427, %v426
        %444 = vmatprep.subr.bf16.mxu0 0
        %445 = vmatpush1.bf16.msra.mxu0 %v435
        %446 = vmatprep.subr.bf16.mxu0 0
        %447 = vmatpush1.bf16.msra.mxu0 %v434
        %448 = vmatprep.subr.bf16.mxu0 0
        %449 = vmatpush1.bf16.msra.mxu0 %v433
        %450 = vmatprep.subr.bf16.mxu0 0
        %451 = vmatpush1.bf16.msra.mxu0 %v432
        %452 = vmatprep.subr.bf16.mxu0 0
        %453 = vmatpush1.bf16.msra.mxu0 %v431
        %454 = vmatprep.subr.bf16.mxu0 0
        %455 = vmatpush1.bf16.msra.mxu0 %v430
        %456 = vmatprep.subr.bf16.mxu0 0
        %457 = vmatpush1.bf16.msra.mxu0 %v429
        %458 = vmatprep.subr.bf16.mxu0 0
        %459 = vmatpush1.bf16.msra.mxu0 %v428
        %460 = vmatprep.subr.bf16.mxu0 0
        %461 = vmatpush2.bf16.msra.mxu0 0
        %462 = vmatprep.subr.bf16.mxu0 0
        %463 = vmatpush2.bf16.msra.mxu0 0
        %464 = vmatprep.subr.bf16.mxu0 0
        %465 = vmatpush2.bf16.msra.mxu0 0
        %466 = vmatprep.subr.bf16.mxu0 0
        %467 = vmatpush2.bf16.msra.mxu0 0
        %468 = vmatprep.subr.bf16.mxu0 0
        %469 = vmatpush2.bf16.msra.mxu0 0
        %470 = vmatprep.subr.bf16.mxu0 0
        %471 = vmatpush2.bf16.msra.mxu0 0
        %472 = vmatprep.subr.bf16.mxu0 0
        %473 = vmatpush2.bf16.msra.mxu0 0
        %474 = vmatprep.subr.bf16.mxu0 0
        %475 = vmatpush2.bf16.msra.mxu0 0
        %476 = vmatprep.mubr.bf16.mxu0 0
        %477 = vmatmul.mubr.bf16.gmra.mxu0 %v369
        %v478 = vpop.f32.mrf.mxu0
        %v479 = vadd.f32 %v394, %v478
        %v480 = vpop.f32.mrf.mxu0
        %v481 = vpop.f32.mrf.mxu0
        %v482 = vadd.f32 %v394, %v481
        %v483 = vpop.f32.mrf.mxu0
        %484 = vmatprep.mubr.bf16.mxu0 0
        %485 = vmatmul.mubr.bf16.gmra.mxu0 %v370
        %v486 = vpop.f32.mrf.mxu0
        %v487 = vadd.f32 %v394, %v486
        %v488 = vpop.f32.mrf.mxu0
        %v489 = vpop.f32.mrf.mxu0
        %v490 = vadd.f32 %v394, %v489
        %v491 = vpop.f32.mrf.mxu0
        %492 = vmatprep.mubr.bf16.mxu0 0
        %493 = vmatmul.mubr.bf16.gmra.mxu0 %v371
        %v494 = vpop.f32.mrf.mxu0
        %v495 = vadd.f32 %v394, %v494
        %v496 = vpop.f32.mrf.mxu0
        %v497 = vpop.f32.mrf.mxu0
        %v498 = vadd.f32 %v394, %v497
        %v499 = vpop.f32.mrf.mxu0
        %500 = vmatprep.mubr.bf16.mxu0 0
        %501 = vmatmul.mubr.bf16.gmra.mxu0 %v372
        %v502 = vpop.f32.mrf.mxu0
        %v503 = vadd.f32 %v394, %v502
        %v504 = vpop.f32.mrf.mxu0
        %v505 = vpop.f32.mrf.mxu0
        %v506 = vpop.f32.mrf.mxu0
        %507 = vdwg.mxu0
        %508 = vmax.xlane.f32.xlu0 %v479
        %v509 = vpop.xlane.xlu0 %508
        %510 = vmax.xlane.f32.xlu0 %v482
        %v511 = vpop.xlane.xlu0 %510
        %512 = vmax.xlane.f32.xlu0 %v487
        %v513 = vpop.xlane.xlu0 %512
        %514 = vmax.xlane.f32.xlu0 %v490
        %v515 = vpop.xlane.xlu0 %514
        %516 = vmax.xlane.f32.xlu0 %v495
        %v517 = vpop.xlane.xlu0 %516
        %518 = vmax.xlane.f32.xlu0 %v498
        %v519 = vpop.xlane.xlu0 %518
        %520 = vmax.xlane.f32.xlu0 %v503
        %v521 = vpop.xlane.xlu0 %520
        %v522 = vsub.f32 %v479, %v509
        %v523 = vsub.f32 %v482, %v511
        %v524 = vsub.f32 %v487, %v513
        %v525 = vsub.f32 %v490, %v515
        %v526 = vsub.f32 %v495, %v517
        %v527 = vsub.f32 %v498, %v519
        %v528 = vsub.f32 %v503, %v521
        %v529 = vmul.f32 %v522, 1.442695
        %v530 = vpow.pop %v529
        %v531 = vmul.f32 %v523, 1.442695
        %v532 = vpow.pop %v531
        %v533 = vmul.f32 %v524, 1.442695
        %v534 = vpow.pop %v533
        %v535 = vmul.f32 %v525, 1.442695
        %v536 = vpow.pop %v535
        %v537 = vmul.f32 %v526, 1.442695
        %v538 = vpow.pop %v537
        %v539 = vmul.f32 %v527, 1.442695
        %v540 = vpow.pop %v539
        %v541 = vmul.f32 %v528, 1.442695
        %v542 = vpow.pop %v541
        %543 = vadd.xlane.f32.xlu0 %v530
        %v544 = vpop.xlane.xlu0 %543
        %545 = vadd.xlane.f32.xlu0 %v532
        %v546 = vpop.xlane.xlu0 %545
        %547 = vadd.xlane.f32.xlu0 %v534
        %v548 = vpop.xlane.xlu0 %547
        %549 = vadd.xlane.f32.xlu0 %v536
        %v550 = vpop.xlane.xlu0 %549
        %551 = vadd.xlane.f32.xlu0 %v538
        %v552 = vpop.xlane.xlu0 %551
        %553 = vadd.xlane.f32.xlu0 %v540
        %v554 = vpop.xlane.xlu0 %553
        %555 = vadd.xlane.f32.xlu0 %v542
        %v556 = vpop.xlane.xlu0 %555
        %v557 = vrcp.pop %v544
        %v558 = vrcp.pop %v546
        %v559 = vrcp.pop %v548
        %v560 = vrcp.pop %v550
        %v561 = vrcp.pop %v552
        %v562 = vrcp.pop %v554
        %v563 = vrcp.pop %v556
        %v564 = vmul.f32 %v530, %v557
        %v565 = vmul.f32 %v532, %v558
        %v566 = vmul.f32 %v534, %v559
        %v567 = vmul.f32 %v536, %v560
        %v568 = vmul.f32 %v538, %v561
        %v569 = vmul.f32 %v540, %v562
        %v570 = vmul.f32 %v542, %v563
        %571 = vst [vmem:[%s230] sm:$0xff] %v564
        %572 = vst [vmem:[%s230 + $0x8] sm:$0xff] %v565
        %573 = vst [vmem:[%s230 + $0x10] sm:$0xff] %v566
        %574 = vst [vmem:[%s230 + $0x18] sm:$0xff] %v567
        %575 = vst [vmem:[%s230 + $0x20] sm:$0xff] %v568
        %576 = vst [vmem:[%s230 + $0x28] sm:$0xff] %v569
        %577 = vst [vmem:[%s230 + $0x30] sm:$0xff] %v570
        %s578 = sand.u32 %s137, 1
        %s579 = scalar_lea.sflag [#allocation3], %s578
        %s580 = sand.u32 %s137, 1
        %s581 = smul.addr %s580, 56
        %s582 = scalar_lea.vmem [#allocation2], %s581
        // Predicated region
        $region41: #{tpu_custom_call.1} parent=39 // pred_check
          %p583 = pneg %p147
        $region42: #{tpu_custom_call.1} parent=39 // pred_check_branch
          %585 = sbr.rel (%p583) target = $region44
        $region43: #{tpu_custom_call.1} parent=39 // pred_region
          %s586 = smul.u32 7, %s19
          %s587 = ssub.s32 25, %s586
          %p588 = scmp.lt.s32.totalorder %s587, 7
          %s589 = scalar_select %p588, %s587, 7
          %s590 = smul.u32 128, %s589
          %s592 = ssub.s32 896, %s590
          %593 = vsyncadd %s579, %s592
          %p594 = scmp.ne.s32.totalorder 0, %s590
          %s595 = smul.addr %s586, 128
          %s596 = scalar_lea.hbm %s5, %s595
          %s597 = smul.u32 8, %s589
          %s598 = sshll.u32 %s582, 4
          %s599 = int_to_ptr.vmem [resolvable:$true] %s598
          %s600 = sshll.u32 %s597, 4
          %604 = dma.vmem_to_hbm [thread:$0]  (%p594), %s599, %s600, %s596, %s579, 128, 128, 8
        $region44: #{tpu_custom_call.1} parent=39 // pred_fallthru
          _
      $region40: #{tpu_custom_call.1} parent=5 // pred_fallthru
        _
      %p605 = scmp.le.s32.totalorder 2, %s14
      // Predicated region
      $region45: #{tpu_custom_call.1} parent=5 // pred_check
        %p606 = pneg %p605
      $region46: #{tpu_custom_call.1} parent=5 // pred_check_branch
        %608 = sbr.rel (%p606) target = $region48
      $region47: #{tpu_custom_call.1} parent=5 // pred_region
        %s609 = ssub.s32 %s14, 2
        // Predicated region
        $region49: #{tpu_custom_call.1} parent=47 // pred_check
          %p610 = pneg %p153
        $region50: #{tpu_custom_call.1} parent=47 // pred_check_branch
          %612 = sbr.rel (%p610) target = $region52
        $region51: #{tpu_custom_call.1} parent=47 // pred_region
          %s613 = sand.u32 %s138, 1
          %s614 = scalar_lea.sflag [#allocation3], %s613
          %s615 = sand.u32 %s138, 1
          %s616 = smul.addr %s615, 56
          %s617 = scalar_lea.vmem [#allocation2], %s616
          %618 = dma.done %s614, 896
        $region52: #{tpu_custom_call.1} parent=47 // pred_fallthru
          _
      $region48: #{tpu_custom_call.1} parent=5 // pred_fallthru
        _
    $region6: #{tpu_custom_call.1} parent=1 // loop_footer
      %s18 = sadd.s32 1, %s14
    $region7: #{tpu_custom_call.1} parent=1 // loop_footer_branch
      %13 = sbr.rel target = $region3
    $region8: #{tpu_custom_call.1} parent=1 // loop_exit
      _
    %619 = vsyncpa [#allocation3], 1
    %s620 = scalar_lea.sflag [#allocation3], 1
    %621 = vsyncpa %s620, 1

</llo_original>
